<compile_context>
chip_gen: v7x
topology: tpu7x:2x2x1
jax: 0.10.0
libtpu: 0.0.40
codegen_flags: <defaults>
</compile_context>

<pallas_src>
import functools

import jax
import jax.numpy as jnp
from jax.experimental import pallas as pl
from jax.experimental.pallas import tpu as pltpu

EPS = 1e-5
MOMENTUM = 0.9

_ROW_TILE_TARGET = 256                  # sublane-axis tile target
_LANE_TILE_TARGET = 4096                # lane-axis tile target (4 MiB f32 blk)
_MAX_BLOCK_BYTES = 4 * 1024 * 1024      # per-block byte budget (two-pass path)
_FUSED_BLOCK_BYTES = 2 * 1024 * 1024    # per-channel resident block budget
_VMEM_LIMIT_BYTES = 32 * 1024 * 1024    # > v5e 16 MiB default, <= v7x scoped


def _round_up(n, m):
    return ((n + m - 1) // m) * m


def _sublane_quantum(dtype):
    # sub-32-bit dtypes pack along sublanes: f32 -> 8, bf16 -> 16, int8 -> 32
    return max(8, 32 // jnp.dtype(dtype).itemsize)


def _pick_tile(dim, quantum, target):
    """Return (tile, padded_dim).

    tile is either the full dim (always a legal block) or a multiple of
    `quantum` that divides padded_dim.  When no divisor <= target exists, the
    array is zero-padded (padded_dim > dim) instead of falling back to a
    whole-dimension block that could blow the VMEM budget."""
    if dim <= target:
        return dim, dim
    top = target - (target % quantum)
    for cand in range(top, quantum - 1, -quantum):
        if dim % cand == 0:
            return cand, dim
    # awkward dim: prefer the largest tile whose zero-padding waste is small
    best_tile, best_pad = quantum, _round_up(dim, quantum)
    for cand in range(top, quantum - 1, -quantum):
        padded = _round_up(dim, cand)
        if padded - dim <= dim // 16:
            return cand, padded
        if padded < best_pad:
            best_tile, best_pad = cand, padded
    return best_tile, best_pad


# ---------------------------------------------------------------------------
# Kernels
# ---------------------------------------------------------------------------

def _row_stats_kernel(x_ref, sum_ref, sq_ref):
    """Per-row sum / sum-of-squares accumulated over the lane-tile grid axis."""
    j = pl.program_id(1)
    x = x_ref[...].astype(jnp.float32)
    s = jnp.sum(x, axis=1, keepdims=True)
    q = jnp.sum(x * x, axis=1, keepdims=True)

    @pl.when(j == 0)
    def _():
        sum_ref[...] = s
        sq_ref[...] = q

    @pl.when(j != 0)
    def _():
        sum_ref[...] += s
        sq_ref[...] += q


def _col_stats_kernel(x_ref, sum_ref, sq_ref):
    """Per-column (channels on lanes) sum / sum-of-squares for 2-D inputs."""
    i = pl.program_id(0)
    x = x_ref[...].astype(jnp.float32)
    s = jnp.sum(x, axis=0, keepdims=True)
    q = jnp.sum(x * x, axis=0, keepdims=True)

    @pl.when(i == 0)
    def _():
        sum_ref[...] = s
        sq_ref[...] = q

    @pl.when(i != 0)
    def _():
        sum_ref[...] += s
        sq_ref[...] += q


def _affine_kernel(x_ref, scale_ref, shift_ref, y_ref):
    """y = x * scale + shift (scale/shift broadcast over the tile)."""
    x = x_ref[...].astype(jnp.float32)
    y_ref[...] = (x * scale_ref[...] + shift_ref[...]).astype(y_ref.dtype)


def _fused4d_train_kernel(x_ref, g_ref, b_ref, y_ref, mean_ref, var_ref):
    """Fused training sweep for one channel: stats + affine on a resident block.

    x block: (N, 1, H, W); gamma/beta blocks: (1, 1, 1, 1)."""
    x = x_ref[...].astype(jnp.float32)
    cnt = x.shape[0] * x.shape[2] * x.shape[3]
    mean = jnp.sum(x, keepdims=True) / cnt          # (1, 1, 1, 1)
    d = x - mean
    var = jnp.sum(d * d, keepdims=True) / cnt       # exact E[(x-mean)^2]
    scale = g_ref[...] * jax.lax.rsqrt(var + EPS)
    y_ref[...] = (d * scale + b_ref[...]).astype(y_ref.dtype)
    mean_ref[...] = mean
    var_ref[...] = var


def _fused2d_train_kernel(x_ref, g_ref, b_ref, y_ref, mean_ref, var_ref):
    """Fused training sweep for small 2-D inputs (whole X resident)."""
    x = x_ref[...].astype(jnp.float32)               # (N, C)
    n = x.shape[0]
    mean = jnp.sum(x, axis=0, keepdims=True) / n
    d = x - mean
    var = jnp.sum(d * d, axis=0, keepdims=True) / n
    scale = g_ref[...] * jax.lax.rsqrt(var + EPS)
    y_ref[...] = (d * scale + b_ref[...]).astype(y_ref.dtype)
    mean_ref[...] = mean
    var_ref[...] = var


# ---------------------------------------------------------------------------
# pallas_call wrappers
# ---------------------------------------------------------------------------

def _row_stats(x2, br, tl):
    R, L = x2.shape
    itemsize = jnp.dtype(x2.dtype).itemsize
    return pl.pallas_call(
        _row_stats_kernel,
        grid=(R // br, L // tl),
        in_specs=[pl.BlockSpec((br, tl), lambda i, j: (i, j))],
        out_specs=(pl.BlockSpec((br, 1), lambda i, j: (i, 0)),
                   pl.BlockSpec((br, 1), lambda i, j: (i, 0))),
        out_shape=(jax.ShapeDtypeStruct((R, 1), jnp.float32),
                   jax.ShapeDtypeStruct((R, 1), jnp.float32)),
        compiler_params=pltpu.CompilerParams(
            dimension_semantics=("parallel", "arbitrary"),
            vmem_limit_bytes=_VMEM_LIMIT_BYTES),
        cost_estimate=pl.CostEstimate(
            flops=int(3 * R * L), transcendentals=0,
            bytes_accessed=int(R * L * itemsize + 2 * R * 4)),
    )(x2)


def _row_affine(x2, scale_rows, shift_rows, br, tl):
    R, L = x2.shape
    itemsize = jnp.dtype(x2.dtype).itemsize
    return pl.pallas_call(
        _affine_kernel,
        grid=(R // br, L // tl),
        in_specs=[pl.BlockSpec((br, tl), lambda i, j: (i, j)),
                  pl.BlockSpec((br, 1), lambda i, j: (i, 0)),
                  pl.BlockSpec((br, 1), lambda i, j: (i, 0))],
        out_specs=pl.BlockSpec((br, tl), lambda i, j: (i, j)),
        out_shape=jax.ShapeDtypeStruct((R, L), x2.dtype),
        compiler_params=pltpu.CompilerParams(
            dimension_semantics=("parallel", "parallel"),
            vmem_limit_bytes=_VMEM_LIMIT_BYTES),
        cost_estimate=pl.CostEstimate(
            flops=int(2 * R * L), transcendentals=0,
            bytes_accessed=int(2 * R * L * itemsize + 2 * R * 4)),
    )(x2, scale_rows, shift_rows)


def _col_stats(x, bn):
    N, C = x.shape
    itemsize = jnp.dtype(x.dtype).itemsize
    return pl.pallas_call(
        _col_stats_kernel,
        grid=(N // bn,),
        in_specs=[pl.BlockSpec((bn, C), lambda i: (i, 0))],
        out_specs=(pl.BlockSpec((1, C), lambda i: (0, 0)),
                   pl.BlockSpec((1, C), lambda i: (0, 0))),
        out_shape=(jax.ShapeDtypeStruct((1, C), jnp.float32),
                   jax.ShapeDtypeStruct((1, C), jnp.float32)),
        compiler_params=pltpu.CompilerParams(
            dimension_semantics=("arbitrary",),
            vmem_limit_bytes=_VMEM_LIMIT_BYTES),
        cost_estimate=pl.CostEstimate(
            flops=int(3 * N * C), transcendentals=0,
            bytes_accessed=int(N * C * itemsize + 2 * C * 4)),
    )(x)


def _col_affine(x, scale, shift, bn):
    N, C = x.shape
    itemsize = jnp.dtype(x.dtype).itemsize
    return pl.pallas_call(
        _affine_kernel,
        grid=(N // bn,),
        in_specs=[pl.BlockSpec((bn, C), lambda i: (i, 0)),
                  pl.BlockSpec((1, C), lambda i: (0, 0)),
                  pl.BlockSpec((1, C), lambda i: (0, 0))],
        out_specs=pl.BlockSpec((bn, C), lambda i: (i, 0)),
        out_shape=jax.ShapeDtypeStruct((N, C), x.dtype),
        compiler_params=pltpu.CompilerParams(
            dimension_semantics=("parallel",),
            vmem_limit_bytes=_VMEM_LIMIT_BYTES),
        cost_estimate=pl.CostEstimate(
            flops=int(2 * N * C), transcendentals=0,
            bytes_accessed=int(2 * N * C * itemsize + 2 * C * 4)),
    )(x, scale, shift)


def _fused_train_4d(x, g4, b4):
    N, C, H, W = x.shape
    itemsize = jnp.dtype(x.dtype).itemsize
    return pl.pallas_call(
        _fused4d_train_kernel,
        grid=(C,),
        in_specs=[pl.BlockSpec((N, 1, H, W), lambda c: (0, c, 0, 0)),
                  pl.BlockSpec((1, 1, 1, 1), lambda c: (0, c, 0, 0)),
                  pl.BlockSpec((1, 1, 1, 1), lambda c: (0, c, 0, 0))],
        out_specs=(pl.BlockSpec((N, 1, H, W), lambda c: (0, c, 0, 0)),
                   pl.BlockSpec((1, 1, 1, 1), lambda c: (0, c, 0, 0)),
                   pl.BlockSpec((1, 1, 1, 1), lambda c: (0, c, 0, 0))),
        out_shape=(jax.ShapeDtypeStruct(x.shape, x.dtype),
                   jax.ShapeDtypeStruct((1, C, 1, 1), jnp.float32),
                   jax.ShapeDtypeStruct((1, C, 1, 1), jnp.float32)),
        compiler_params=pltpu.CompilerParams(
            dimension_semantics=("parallel",),
            vmem_limit_bytes=_VMEM_LIMIT_BYTES),
        cost_estimate=pl.CostEstimate(
            flops=int(6 * N * C * H * W), transcendentals=0,
            bytes_accessed=int(2 * N * C * H * W * itemsize + 2 * C * 4)),
    )(x, g4, b4)


def _fused_train_2d(x, g, b):
    N, C = x.shape
    itemsize = jnp.dtype(x.dtype).itemsize
    return pl.pallas_call(
        _fused2d_train_kernel,
        grid=(1,),
        in_specs=[pl.BlockSpec((N, C), lambda i: (0, 0)),
                  pl.BlockSpec((1, C), lambda i: (0, 0)),
                  pl.BlockSpec((1, C), lambda i: (0, 0))],
        out_specs=(pl.BlockSpec((N, C), lambda i: (0, 0)),
                   pl.BlockSpec((1, C), lambda i: (0, 0)),
                   pl.BlockSpec((1, C), lambda i: (0, 0))),
        out_shape=(jax.ShapeDtypeStruct((N, C), x.dtype),
                   jax.ShapeDtypeStruct((1, C), jnp.float32),
                   jax.ShapeDtypeStruct((1, C), jnp.float32)),
        compiler_params=pltpu.CompilerParams(
            dimension_semantics=("arbitrary",),
            vmem_limit_bytes=_VMEM_LIMIT_BYTES),
        cost_estimate=pl.CostEstimate(
            flops=int(6 * N * C), transcendentals=0,
            bytes_accessed=int(2 * N * C * itemsize + 2 * C * 4)),
    )(x, g, b)


# ---------------------------------------------------------------------------
# Forward pass (mirrors batch_norm() / BatchNorm.forward)
# ---------------------------------------------------------------------------

@functools.partial(jax.jit, static_argnames=("training", "fused_block_bytes"))
def batch_norm_forward(x, gamma, beta, moving_mean, moving_var,
                       training=True, fused_block_bytes=_FUSED_BLOCK_BYTES):
    """Mirrors batch_norm() from the PyTorch module.

    x: (N, C, H, W) or (N, C); gamma/beta/moving_*: (1, C, 1, 1) or (1, C).
    Returns (Y, new_moving_mean, new_moving_var).  Training uses batch stats
    and the (biased, as in the reference) moving-stat update; eval normalizes
    with the moving stats.  torch.is_grad_enabled() is modeled by `training`.
    """
    assert x.ndim in (2, 4), "len(X.shape) must be in (2, 4)"
    param_shape = gamma.shape
    C = x.shape[1]

    g = gamma.reshape(1, C).astype(jnp.float32)
    b = beta.reshape(1, C).astype(jnp.float32)
    mm = moving_mean.reshape(1, C).astype(jnp.float32)
    mv = moving_var.reshape(1, C).astype(jnp.float32)

    if x.ndim == 4:
        N, _, H, W = x.shape
        L, R = H * W, N * C
        rq = _sublane_quantum(x.dtype)

        # Fused resident-channel path: one read of X + one write of Y.
        fused_ok = training and (
            N * _round_up(H, 8) * _round_up(W, 128) * 4 <= fused_block_bytes)

        if fused_ok:
            y, mean4, var4 = _fused_train_4d(
                x, g.reshape(1, C, 1, 1), b.reshape(1, C, 1, 1))
            mean = mean4.reshape(1, C)
            var = var4.reshape(1, C)
        else:
            x2 = x.reshape(R, L)          # free view: no transpose, no copy
            br, R_pad = _pick_tile(R, rq, _ROW_TILE_TARGET)
            tl, L_pad = _pick_tile(L, 128, _LANE_TILE_TARGET)
            # >= 2 row blocks when possible so both v7x TensorCores stream.
            if R_pad // br == 1 and R_pad % (2 * rq) == 0:
                br = R_pad // 2
            x2p = x2
            if (R_pad, L_pad) != (R, L):
                x2p = jnp.pad(x2, ((0, R_pad - R), (0, L_pad - L)))

            if training:
                row_sum, row_sq = _row_stats(x2p, br, tl)      # (R_pad, 1) f32
                row_sum = row_sum[:R].reshape(N, C)
                row_sq = row_sq[:R].reshape(N, C)
                cnt = float(N * L)
                mean = row_sum.sum(axis=0, keepdims=True) / cnt
                e_x2 = row_sq.sum(axis=0, keepdims=True) / cnt
                var = jnp.maximum(e_x2 - mean * mean, 0.0)     # clamp cancels
            else:
                mean, var = mm, mv

            scale = g * jax.lax.rsqrt(var + EPS)               # (1, C), tiny
            shift = b - mean * scale
            scale_rows = jnp.broadcast_to(scale, (N, C)).reshape(R, 1)
            shift_rows = jnp.broadcast_to(shift, (N, C)).reshape(R, 1)
            if R_pad != R:
                scale_rows = jnp.pad(scale_rows, ((0, R_pad - R), (0, 0)))
                shift_rows = jnp.pad(shift_rows, ((0, R_pad - R), (0, 0)))
            yp = _row_affine(x2p, scale_rows, shift_rows, br, tl)
            if (R_pad, L_pad) != (R, L):
                yp = yp[:R, :L]
            y = yp.reshape(x.shape)
    else:
        N = x.shape[0]
        rq = _sublane_quantum(x.dtype)
        fused_ok = training and (
            _round_up(N, 8) * _round_up(C, 128) * 4 <= fused_block_bytes)

        if fused_ok:
            y, mean, var = _fused_train_2d(x, g, b)
        else:
            # Lane folding: pack k = 128//C consecutive rows onto the lanes so
            # blocks / stores are lane-dense for small C.
            k = 1
            if C < 128 and 128 % C == 0 and N % (128 // C) == 0:
                k = 128 // C
            Nf, Cf = N // k, C * k
            xf = x.reshape(Nf, Cf)        # free row-major view
            itemsize = jnp.dtype(x.dtype).itemsize
            bn_target = max(
                rq,
                min(1024, (_MAX_BLOCK_BYTES // max(1, Cf * itemsize))
                    // rq * rq))
            bn, Nf_pad = _pick_tile(Nf, rq, bn_target)
            xfp = xf
            if Nf_pad != Nf:
                xfp = jnp.pad(xf, ((0, Nf_pad - Nf), (0, 0)))

            if training:
                ch_sum_f, ch_sq_f = _col_stats(xfp, bn)        # (1, Cf) f32
                ch_sum = ch_sum_f.reshape(k, C).sum(axis=0, keepdims=True)
                ch_sq = ch_sq_f.reshape(k, C).sum(axis=0, keepdims=True)
                cnt = float(N)
                mean = ch_sum / cnt
                var = jnp.maximum(ch_sq / cnt - mean * mean, 0.0)
            else:
                mean, var = mm, mv

            scale = g * jax.lax.rsqrt(var + EPS)
            shift = b - mean * scale
            scale_f = jnp.tile(scale, (1, k)) if k > 1 else scale
            shift_f = jnp.tile(shift, (1, k)) if k > 1 else shift
            yf = _col_affine(xfp, scale_f, shift_f, bn)
            if Nf_pad != Nf:
                yf = yf[:Nf]
            y = yf.reshape(N, C)

    if training:
        new_mm = MOMENTUM * mm + (1.0 - MOMENTUM) * mean
        new_mv = MOMENTUM * mv + (1.0 - MOMENTUM) * var
    else:
        new_mm, new_mv = mm, mv

    return (y,
            new_mm.reshape(param_shape).astype(moving_mean.dtype),
            new_mv.reshape(param_shape).astype(moving_var.dtype))


class BatchNormPallas:
    """Deterministic stand-in for the PyTorch BatchNorm module."""

    def __init__(self, num_features, num_dims):
        if num_dims == 2:
            shape = (1, num_features)
        else:
            shape = (1, num_features, 1, 1)
        self.gamma = jnp.ones(shape, jnp.float32)
        self.beta = jnp.zeros(shape, jnp.float32)
        self.moving_mean = jnp.zeros(shape, jnp.float32)
        self.moving_var = jnp.ones(shape, jnp.float32)

    def __call__(self, x, training=True):
        y, self.moving_mean, self.moving_var = batch_norm_forward(
            x, self.gamma, self.beta, self.moving_mean, self.moving_var,
            training=training)
        return y


if __name__ == "__main__":
    key = jax.random.PRNGKey(0)
    k4, k2 = jax.random.split(key)

    # ---- 4-D case (num_dims=4), the STDP-GCN use case ----
    N, C, H, W = 2, 4, 16, 16
    x = jax.random.normal(k4, (N, C, H, W), dtype=jnp.float32)

    bn = BatchNormPallas(num_features=C, num_dims=4)
    gamma0, beta0 = bn.gamma, bn.beta
    mm0, mv0 = bn.moving_mean, bn.moving_var

    y = jax.block_until_ready(bn(x, training=True))          # fused path
    mm1 = jax.block_until_ready(bn.moving_mean)
    mv1 = jax.block_until_ready(bn.moving_var)

    mean_r = x.mean(axis=(0, 2, 3), keepdims=True)
    var_r = ((x - mean_r) ** 2).mean(axis=(0, 2, 3), keepdims=True)
    y_r = gamma0 * (x - mean_r) / jnp.sqrt(var_r + EPS) + beta0
    mm_r = MOMENTUM * mm0 + (1.0 - MOMENTUM) * mean_r
    mv_r = MOMENTUM * mv0 + (1.0 - MOMENTUM) * var_r

    assert y.shape == x.shape and y.dtype == x.dtype
    assert jnp.allclose(y, y_r, atol=1e-5, rtol=1e-5)
    assert jnp.allclose(mm1, mm_r, atol=1e-5, rtol=1e-5)
    assert jnp.allclose(mv1, mv_r, atol=1e-5, rtol=1e-5)

    # Same input through the tiled two-pass training path (large-tensor route).
    y_tp, mm_tp, mv_tp = batch_norm_forward(
        x, gamma0, beta0, mm0, mv0, training=True, fused_block_bytes=0)
    jax.block_until_ready(y_tp)
    assert jnp.allclose(y_tp, y_r, atol=1e-5, rtol=1e-5)
    assert jnp.allclose(mm_tp, mm_r, atol=1e-5, rtol=1e-5)
    assert jnp.allclose(mv_tp, mv_r, atol=1e-5, rtol=1e-5)

    # Inference branch (uses the just-updated moving stats).
    y_eval = jax.block_until_ready(bn(x, training=False))
    y_eval_r = gamma0 * (x - mm1) / jnp.sqrt(mv1 + EPS) + beta0
    assert y_eval.shape == x.shape
    assert jnp.allclose(y_eval, y_eval_r, atol=1e-5, rtol=1e-5)

    # ---- 2-D case (num_dims=2) ----
    N2, C2 = 8, 32
    x2d = jax.random.normal(k2, (N2, C2), dtype=jnp.float32)
    bn2 = BatchNormPallas(num_features=C2, num_dims=2)
    g2, b2 = bn2.gamma, bn2.beta
    mm20, mv20 = bn2.moving_mean, bn2.moving_var

    y2 = jax.block_until_ready(bn2(x2d, training=True))      # fused 2-D path
    mean2_r = x2d.mean(axis=0)
    var2_r = ((x2d - mean2_r) ** 2).mean(axis=0)
    y2_r = g2 * (x2d - mean2_r) / jnp.sqrt(var2_r + EPS) + b2
    mm2_r = MOMENTUM * mm20 + (1.0 - MOMENTUM) * mean2_r
    mv2_r = MOMENTUM * mv20 + (1.0 - MOMENTUM) * var2_r

    assert jnp.allclose(y2, y2_r, atol=1e-5, rtol=1e-5)
    assert jnp.allclose(bn2.moving_mean, mm2_r, atol=1e-5, rtol=1e-5)
    assert jnp.allclose(bn2.moving_var, mv2_r, atol=1e-5, rtol=1e-5)

    # Lane-folded two-pass 2-D path (C=32 folds 4 rows onto 128 lanes).
    y2_tp, mm2_tp, mv2_tp = batch_norm_forward(
        x2d, g2, b2, mm20, mv20, training=True, fused_block_bytes=0)
    jax.block_until_ready(y2_tp)
    assert jnp.allclose(y2_tp, y2_r, atol=1e-5, rtol=1e-5)
    assert jnp.allclose(mm2_tp, mm2_r, atol=1e-5, rtol=1e-5)
    assert jnp.allclose(mv2_tp, mv2_r, atol=1e-5, rtol=1e-5)

    # 2-D inference branch.
    y2_eval = jax.block_until_ready(bn2(x2d, training=False))
    y2_eval_r = (g2 * (x2d - bn2.moving_mean)
                 / jnp.sqrt(bn2.moving_var + EPS) + b2)
    assert jnp.allclose(y2_eval, y2_eval_r, atol=1e-5, rtol=1e-5)

    print("KERNEL_OK")
</pallas_src>

<mosaic_0001>
module attributes {stable_mosaic.version = 11 : i64} {
  func.func @_fused4d_train_kernel(%arg0: i32, %arg1: memref<2x1x16x16xf32, #tpu.memory_space<vmem>>, %arg2: memref<1x1x1x1xf32, #tpu.memory_space<vmem>>, %arg3: memref<1x1x1x1xf32, #tpu.memory_space<vmem>>, %arg4: memref<2x1x16x16xf32, #tpu.memory_space<vmem>>, %arg5: memref<1x1x1x1xf32, #tpu.memory_space<vmem>>, %arg6: memref<1x1x1x1xf32, #tpu.memory_space<vmem>>) attributes {dimension_semantics = [#tpu.dimension_semantics<parallel>], iteration_bounds = array<i64: 4>, scalar_prefetch = 0 : i64, scratch_operands = 0 : i64, tpu.core_type = #tpu.core_type<tc>, window_params = [{transform_indices = @transform_0, window_bounds = array<i64: 2, 1, 16, 16>}, {transform_indices = @transform_1, window_bounds = array<i64: 1, 1, 1, 1>}, {transform_indices = @transform_2, window_bounds = array<i64: 1, 1, 1, 1>}, {transform_indices = @transform_3, window_bounds = array<i64: 2, 1, 16, 16>}, {transform_indices = @transform_4, window_bounds = array<i64: 1, 1, 1, 1>}, {transform_indices = @transform_5, window_bounds = array<i64: 1, 1, 1, 1>}]} {
    %c0 = arith.constant 0 : index
    %c0_0 = arith.constant 0 : index
    %c0_1 = arith.constant 0 : index
    %c0_2 = arith.constant 0 : index
    %0 = vector.load %arg1[%c0, %c0_0, %c0_1, %c0_2] : memref<2x1x16x16xf32, #tpu.memory_space<vmem>>, vector<2x1x16x16xf32>
    %1 = vector.shape_cast %0 : vector<2x1x16x16xf32> to vector<1x2x1x16x16xf32>
    %cst = arith.constant dense<0.000000e+00> : vector<1xf32>
    %2 = vector.multi_reduction <add>, %1, %cst [1, 2, 3, 4] : vector<1x2x1x16x16xf32> to vector<1xf32>
    %3 = vector.shape_cast %2 : vector<1xf32> to vector<1x1x1x1x1xf32>
    %4 = vector.extract %3[0, 0, 0, 0, 0] : f32 from vector<1x1x1x1x1xf32>
    %5 = vector.broadcast %4 : f32 to vector<1x1x1x1xf32>
    %cst_3 = arith.constant 5.120000e+02 : f32
    %6 = vector.broadcast %cst_3 : f32 to vector<1x1x1x1xf32>
    %7 = arith.divf %5, %6 : vector<1x1x1x1xf32>
    %8 = vector.broadcast %7 : vector<1x1x1x1xf32> to vector<2x1x16x16xf32>
    %9 = arith.subf %0, %8 : vector<2x1x16x16xf32>
    %10 = arith.mulf %9, %9 : vector<2x1x16x16xf32>
    %11 = vector.shape_cast %10 : vector<2x1x16x16xf32> to vector<1x2x1x16x16xf32>
    %cst_4 = arith.constant dense<0.000000e+00> : vector<1xf32>
    %12 = vector.multi_reduction <add>, %11, %cst_4 [1, 2, 3, 4] : vector<1x2x1x16x16xf32> to vector<1xf32>
    %13 = vector.shape_cast %12 : vector<1xf32> to vector<1x1x1x1x1xf32>
    %14 = vector.extract %13[0, 0, 0, 0, 0] : f32 from vector<1x1x1x1x1xf32>
    %15 = vector.broadcast %14 : f32 to vector<1x1x1x1xf32>
    %cst_5 = arith.constant 5.120000e+02 : f32
    %16 = vector.broadcast %cst_5 : f32 to vector<1x1x1x1xf32>
    %17 = arith.divf %15, %16 : vector<1x1x1x1xf32>
    %c0_6 = arith.constant 0 : index
    %c0_7 = arith.constant 0 : index
    %c0_8 = arith.constant 0 : index
    %c0_9 = arith.constant 0 : index
    %18 = vector.load %arg2[%c0_6, %c0_7, %c0_8, %c0_9] : memref<1x1x1x1xf32, #tpu.memory_space<vmem>>, vector<1x1x1x1xf32>
    %cst_10 = arith.constant 9.99999974E-6 : f32
    %19 = vector.broadcast %cst_10 : f32 to vector<1x1x1x1xf32>
    %20 = arith.addf %17, %19 : vector<1x1x1x1xf32>
    %21 = math.rsqrt %20 : vector<1x1x1x1xf32>
    %22 = arith.mulf %18, %21 : vector<1x1x1x1xf32>
    %23 = vector.broadcast %22 : vector<1x1x1x1xf32> to vector<2x1x16x16xf32>
    %24 = arith.mulf %9, %23 : vector<2x1x16x16xf32>
    %c0_11 = arith.constant 0 : index
    %c0_12 = arith.constant 0 : index
    %c0_13 = arith.constant 0 : index
    %c0_14 = arith.constant 0 : index
    %25 = vector.load %arg3[%c0_11, %c0_12, %c0_13, %c0_14] : memref<1x1x1x1xf32, #tpu.memory_space<vmem>>, vector<1x1x1x1xf32>
    %26 = vector.broadcast %25 : vector<1x1x1x1xf32> to vector<2x1x16x16xf32>
    %27 = arith.addf %24, %26 : vector<2x1x16x16xf32>
    %c0_15 = arith.constant 0 : index
    %c0_16 = arith.constant 0 : index
    %c0_17 = arith.constant 0 : index
    %c0_18 = arith.constant 0 : index
    %28 = vector.load %arg4[%c0_15, %c0_16, %c0_17, %c0_18] : memref<2x1x16x16xf32, #tpu.memory_space<vmem>>, vector<2x1x16x16xf32>
    tpu.vector_store %arg4[%c0_15, %c0_16, %c0_17, %c0_18], %27 {strides = array<i32>} : memref<2x1x16x16xf32, #tpu.memory_space<vmem>>, vector<2x1x16x16xf32>,
    %c0_19 = arith.constant 0 : index
    %c0_20 = arith.constant 0 : index
    %c0_21 = arith.constant 0 : index
    %c0_22 = arith.constant 0 : index
    %29 = vector.load %arg5[%c0_19, %c0_20, %c0_21, %c0_22] : memref<1x1x1x1xf32, #tpu.memory_space<vmem>>, vector<1x1x1x1xf32>
    tpu.vector_store %arg5[%c0_19, %c0_20, %c0_21, %c0_22], %7 {strides = array<i32>} : memref<1x1x1x1xf32, #tpu.memory_space<vmem>>, vector<1x1x1x1xf32>,
    %c0_23 = arith.constant 0 : index
    %c0_24 = arith.constant 0 : index
    %c0_25 = arith.constant 0 : index
    %c0_26 = arith.constant 0 : index
    %30 = vector.load %arg6[%c0_23, %c0_24, %c0_25, %c0_26] : memref<1x1x1x1xf32, #tpu.memory_space<vmem>>, vector<1x1x1x1xf32>
    tpu.vector_store %arg6[%c0_23, %c0_24, %c0_25, %c0_26], %17 {strides = array<i32>} : memref<1x1x1x1xf32, #tpu.memory_space<vmem>>, vector<1x1x1x1xf32>,
    return
  }
  func.func @transform_0(%arg0: i32) -> (i32, i32, i32, i32) {
    %c0_i32 = arith.constant 0 : i32
    %c0_i32_0 = arith.constant 0 : i32
    %c0_i32_1 = arith.constant 0 : i32
    %c0_i32_2 = arith.constant 0 : i32
    return %c0_i32, %arg0, %c0_i32_0, %c0_i32_1 : i32, i32, i32, i32
  }
  func.func @transform_1(%arg0: i32) -> (i32, i32, i32, i32) {
    %c0_i32 = arith.constant 0 : i32
    %c0_i32_0 = arith.constant 0 : i32
    %c0_i32_1 = arith.constant 0 : i32
    %c0_i32_2 = arith.constant 0 : i32
    return %c0_i32, %arg0, %c0_i32_0, %c0_i32_1 : i32, i32, i32, i32
  }
  func.func @transform_2(%arg0: i32) -> (i32, i32, i32, i32) {
    %c0_i32 = arith.constant 0 : i32
    %c0_i32_0 = arith.constant 0 : i32
    %c0_i32_1 = arith.constant 0 : i32
    %c0_i32_2 = arith.constant 0 : i32
    return %c0_i32, %arg0, %c0_i32_0, %c0_i32_1 : i32, i32, i32, i32
  }
  func.func @transform_3(%arg0: i32) -> (i32, i32, i32, i32) {
    %c0_i32 = arith.constant 0 : i32
    %c0_i32_0 = arith.constant 0 : i32
    %c0_i32_1 = arith.constant 0 : i32
    %c0_i32_2 = arith.constant 0 : i32
    return %c0_i32, %arg0, %c0_i32_0, %c0_i32_1 : i32, i32, i32, i32
  }
  func.func @transform_4(%arg0: i32) -> (i32, i32, i32, i32) {
    %c0_i32 = arith.constant 0 : i32
    %c0_i32_0 = arith.constant 0 : i32
    %c0_i32_1 = arith.constant 0 : i32
    %c0_i32_2 = arith.constant 0 : i32
    return %c0_i32, %arg0, %c0_i32_0, %c0_i32_1 : i32, i32, i32, i32
  }
  func.func @transform_5(%arg0: i32) -> (i32, i32, i32, i32) {
    %c0_i32 = arith.constant 0 : i32
    %c0_i32_0 = arith.constant 0 : i32
    %c0_i32_1 = arith.constant 0 : i32
    %c0_i32_2 = arith.constant 0 : i32
    return %c0_i32, %arg0, %c0_i32_0, %c0_i32_1 : i32, i32, i32, i32
  }
}

</mosaic_0001>

<llo_original>
// kernel: batch_norm_forward.1
$region0: #{batch_norm_forward.1}
  #allocation0 [shape = 'u32[]', space=smem, size = 0x4, offset = 0x4, fixed_abs, tag = 'smem constant byte address 0x4 - core index']
  #allocation1 [shape = 'u32[144,128]{1,0:T(1,128)}', space=vmem, size = 0x12000, scoped, tag = 'internal scratch']
  #allocation6 [shape = 's32[]', space=sflag, size = 0x4, offset = 0, fixed_abs, tag = 'sflag constant byte address 0x0 - dummy sync flag']
  #allocation8 [shape = 's32[]', space=sflag, size = 0x4, offset = 0, fixed_abs, tag = 'sflag constant byte address 0x0 - dummy sync flag']
  %s0 = inlined_call_operand.hbm [shape: f32[2,4,16,16], index: 0, kind: input, shape index: {}]
  %s1 = inlined_call_operand.vmem [shape: f32[1,4,1,1], index: 1, kind: input, shape index: {}]
  %s2 = inlined_call_operand.vmem [shape: f32[1,4,1,1], index: 2, kind: input, shape index: {}]
  %s3 = inlined_call_operand.hbm [shape: f32[2,4,16,16], index: 3, kind: output, shape index: {0}]
  %s4 = inlined_call_operand.vmem [shape: f32[1,4,1,1], index: 4, kind: output, shape index: {1}]
  %s5 = inlined_call_operand.vmem [shape: f32[1,4,1,1], index: 5, kind: output, shape index: {2}]
  %6 = xla_tuple %s3, %s4, %s5
  %s7 = sld [smem:[#allocation0]]
  $region65: #{batch_norm_forward.1} parent=0
    _
  %s9 = ssub.s32 1, %s7
  %s10 = scalar_select 0, %s9, %s7
  $region1: #{batch_norm_forward.1} parent=0
    #allocation2 [shape = 'u8[32768]{0}', space=vmem, size = 0x8000, scoped, tag = 'input window, operand 0']
    #allocation3 [shape = 's32[2]{0}', space=sflag, size = 0x8, scoped, tag = 'scoped memory for batch_norm_forward.1']
    #allocation4 [shape = 's32[2]{0}', space=sflag, size = 0x8, scoped, tag = 'scoped memory for batch_norm_forward.1']
    #allocation5 [shape = 'u8[32768]{0}', space=vmem, size = 0x8000, scoped, tag = 'output window, operand 0']
    %11 = vsyncpa [#allocation3], 0
    %s12 = scalar_lea.sflag [#allocation3], 1
    %13 = vsyncpa %s12, 0
    %14 = vsyncpa [#allocation4], 0
    %s15 = scalar_lea.sflag [#allocation4], 1
    %16 = vsyncpa %s15, 0
    loop: start=0, step=1, limit=6
    $region2: #{batch_norm_forward.1} parent=1 // loop_pre_header
      _
    $region3: #{batch_norm_forward.1} parent=1 // loop_header
      %s18 = sphi 0, %s22
      %p19 = scmp.ge.s32.totalorder %s18, 6
      %s28 = sphi 0, %s30
      %s31 = sphi 0, %s28
      %s32 = sphi 0, %s31
      %s48 = sphi 0, %s32
      %s54 = sphi 0, %s56
      %s57 = sphi 0, %s54
      %s58 = sphi 0, %s57
      %s74 = sphi 0, %s58
      %s80 = sphi 0, %s82
      %s83 = sphi 0, %s80
      %s84 = sphi 0, %s83
      %s100 = sphi 0, %s84
      %s106 = sphi 0, %s108
      %s109 = sphi 0, %s106
      %s110 = sphi 0, %s109
      %s126 = sphi 0, %s110
      %s132 = sphi 0, %s134
      %s135 = sphi 0, %s132
      %s136 = sphi 0, %s135
      %s152 = sphi 0, %s136
      %s158 = sphi 0, %s160
      %s161 = sphi 0, %s158
      %s162 = sphi 0, %s161
      %s178 = sphi 0, %s162
    $region4: #{batch_norm_forward.1} parent=1 // loop_header_branch
      %21 = sbr.rel (%p19) target = $region8
    $region5: #{batch_norm_forward.1} parent=1 // loop_body
      %s23 = ssub.s32 %s18, 1
      %s24 = ssub.s32 %s18, 2
      %s25 = sadd.s32 %s18, 1
      %s26 = ssub.s32 %s18, %s25
      %p27 = scmp.eq.s32.totalorder %s26, 0
      %s29 = sadd.s32 %s28, 1
      %s30 = scalar_select %p27, %s28, %s29
      %p33 = pneg %p27
      %p34 = scmp.eq.s32.totalorder %s18, 3
      %p35 = por %p33, %p34
      %p36 = scmp.ne.s32.totalorder %s28, %s31
      %p37 = scmp.eq.s32.totalorder %s18, 0
      %p38 = por %p36, %p37
      %p39 = scmp.ne.s32.totalorder %s28, %s31
      %p40 = scmp.eq.s32.totalorder %s23, 3
      %p41 = por %p39, %p40
      %p42 = scmp.ne.s32.totalorder %s31, %s32
      %p43 = scmp.eq.s32.totalorder %s23, 0
      %p44 = por %p42, %p43
      %p45 = scmp.ne.s32.totalorder %s31, %s32
      %p46 = scmp.eq.s32.totalorder %s24, 3
      %p47 = por %p45, %p46
      %p49 = scmp.ne.s32.totalorder %s32, %s48
      %p50 = scmp.eq.s32.totalorder %s24, 0
      %p51 = por %p49, %p50
      %s52 = ssub.s32 %s18, %s25
      %p53 = scmp.eq.s32.totalorder %s52, 0
      %s55 = sadd.s32 %s54, 1
      %s56 = scalar_select %p53, %s54, %s55
      %p59 = pneg %p53
      %p60 = scmp.eq.s32.totalorder %s18, 3
      %p61 = por %p59, %p60
      %p62 = scmp.ne.s32.totalorder %s54, %s57
      %p63 = scmp.eq.s32.totalorder %s18, 0
      %p64 = por %p62, %p63
      %p65 = scmp.ne.s32.totalorder %s54, %s57
      %p66 = scmp.eq.s32.totalorder %s23, 3
      %p67 = por %p65, %p66
      %p68 = scmp.ne.s32.totalorder %s57, %s58
      %p69 = scmp.eq.s32.totalorder %s23, 0
      %p70 = por %p68, %p69
      %p71 = scmp.ne.s32.totalorder %s57, %s58
      %p72 = scmp.eq.s32.totalorder %s24, 3
      %p73 = por %p71, %p72
      %p75 = scmp.ne.s32.totalorder %s58, %s74
      %p76 = scmp.eq.s32.totalorder %s24, 0
      %p77 = por %p75, %p76
      %s78 = ssub.s32 %s18, %s25
      %p79 = scmp.eq.s32.totalorder %s78, 0
      %s81 = sadd.s32 %s80, 1
      %s82 = scalar_select %p79, %s80, %s81
      %p85 = pneg %p79
      %p86 = scmp.eq.s32.totalorder %s18, 3
      %p87 = por %p85, %p86
      %p88 = scmp.ne.s32.totalorder %s80, %s83
      %p89 = scmp.eq.s32.totalorder %s18, 0
      %p90 = por %p88, %p89
      %p91 = scmp.ne.s32.totalorder %s80, %s83
      %p92 = scmp.eq.s32.totalorder %s23, 3
      %p93 = por %p91, %p92
      %p94 = scmp.ne.s32.totalorder %s83, %s84
      %p95 = scmp.eq.s32.totalorder %s23, 0
      %p96 = por %p94, %p95
      %p97 = scmp.ne.s32.totalorder %s83, %s84
      %p98 = scmp.eq.s32.totalorder %s24, 3
      %p99 = por %p97, %p98
      %p101 = scmp.ne.s32.totalorder %s84, %s100
      %p102 = scmp.eq.s32.totalorder %s24, 0
      %p103 = por %p101, %p102
      %s104 = ssub.s32 %s18, %s25
      %p105 = scmp.eq.s32.totalorder %s104, 0
      %s107 = sadd.s32 %s106, 1
      %s108 = scalar_select %p105, %s106, %s107
      %p111 = pneg %p105
      %p112 = scmp.eq.s32.totalorder %s18, 3
      %p113 = por %p111, %p112
      %p114 = scmp.ne.s32.totalorder %s106, %s109
      %p115 = scmp.eq.s32.totalorder %s18, 0
      %p116 = por %p114, %p115
      %p117 = scmp.ne.s32.totalorder %s106, %s109
      %p118 = scmp.eq.s32.totalorder %s23, 3
      %p119 = por %p117, %p118
      %p120 = scmp.ne.s32.totalorder %s109, %s110
      %p121 = scmp.eq.s32.totalorder %s23, 0
      %p122 = por %p120, %p121
      %p123 = scmp.ne.s32.totalorder %s109, %s110
      %p124 = scmp.eq.s32.totalorder %s24, 3
      %p125 = por %p123, %p124
      %p127 = scmp.ne.s32.totalorder %s110, %s126
      %p128 = scmp.eq.s32.totalorder %s24, 0
      %p129 = por %p127, %p128
      %s130 = ssub.s32 %s18, %s25
      %p131 = scmp.eq.s32.totalorder %s130, 0
      %s133 = sadd.s32 %s132, 1
      %s134 = scalar_select %p131, %s132, %s133
      %p137 = pneg %p131
      %p138 = scmp.eq.s32.totalorder %s18, 3
      %p139 = por %p137, %p138
      %p140 = scmp.ne.s32.totalorder %s132, %s135
      %p141 = scmp.eq.s32.totalorder %s18, 0
      %p142 = por %p140, %p141
      %p143 = scmp.ne.s32.totalorder %s132, %s135
      %p144 = scmp.eq.s32.totalorder %s23, 3
      %p145 = por %p143, %p144
      %p146 = scmp.ne.s32.totalorder %s135, %s136
      %p147 = scmp.eq.s32.totalorder %s23, 0
      %p148 = por %p146, %p147
      %p149 = scmp.ne.s32.totalorder %s135, %s136
      %p150 = scmp.eq.s32.totalorder %s24, 3
      %p151 = por %p149, %p150
      %p153 = scmp.ne.s32.totalorder %s136, %s152
      %p154 = scmp.eq.s32.totalorder %s24, 0
      %p155 = por %p153, %p154
      %s156 = ssub.s32 %s18, %s25
      %p157 = scmp.eq.s32.totalorder %s156, 0
      %s159 = sadd.s32 %s158, 1
      %s160 = scalar_select %p157, %s158, %s159
      %p163 = pneg %p157
      %p164 = scmp.eq.s32.totalorder %s18, 3
      %p165 = por %p163, %p164
      %p166 = scmp.ne.s32.totalorder %s158, %s161
      %p167 = scmp.eq.s32.totalorder %s18, 0
      %p168 = por %p166, %p167
      %p169 = scmp.ne.s32.totalorder %s158, %s161
      %p170 = scmp.eq.s32.totalorder %s23, 3
      %p171 = por %p169, %p170
      %p172 = scmp.ne.s32.totalorder %s161, %s162
      %p173 = scmp.eq.s32.totalorder %s23, 0
      %p174 = por %p172, %p173
      %p175 = scmp.ne.s32.totalorder %s161, %s162
      %p176 = scmp.eq.s32.totalorder %s24, 3
      %p177 = por %p175, %p176
      %p179 = scmp.ne.s32.totalorder %s162, %s178
      %p180 = scmp.eq.s32.totalorder %s24, 0
      %p181 = por %p179, %p180
      %p182 = scmp.le.s32.totalorder 1, %s18
      %p183 = scmp.lt.s32.totalorder %s18, 5
      %p184 = pnand %p182, %p183
      %p185 = pneg %p184
      // Predicated region
      $region9: #{batch_norm_forward.1} parent=5 // pred_check
        _
      $region10: #{batch_norm_forward.1} parent=5 // pred_check_branch
        %187 = sbr.rel (%p184) target = $region12
      $region11: #{batch_norm_forward.1} parent=5 // pred_region
        %s188 = ssub.s32 %s18, 1
      $region12: #{batch_norm_forward.1} parent=5 // pred_fallthru
        _
      %p189 = scmp.lt.s32.totalorder %s18, 4
      // Predicated region
      $region13: #{batch_norm_forward.1} parent=5 // pred_check
        %p190 = pneg %p189
      $region14: #{batch_norm_forward.1} parent=5 // pred_check_branch
        %192 = sbr.rel (%p190) target = $region16
      $region15: #{batch_norm_forward.1} parent=5 // pred_region
        // Predicated region
        $region17: #{batch_norm_forward.1} parent=15 // pred_check
          %p193 = pneg %p38
        $region18: #{batch_norm_forward.1} parent=15 // pred_check_branch
          %195 = sbr.rel (%p193) target = $region20
        $region19: #{batch_norm_forward.1} parent=15 // pred_region
          #allocation7 [shape = 'u32[6]{0}', space=smem, size = 0x18, scoped, tag = 'DMA stride descriptor']
          %s196 = sand.u32 %s28, 1
          %s197 = scalar_lea.sflag [#allocation3], %s196
          %s198 = sand.u32 %s28, 1
          %s199 = smul.addr %s198, 32
          %s200 = scalar_lea.vmem [#allocation2], %s199
          %s202 = ssub.s32 512, 512
          %203 = vsyncadd %s197, %s202
          %s204 = smul.addr %s18, 2
          %s205 = smul.addr %s204, 128
          %s206 = scalar_lea.hbm %s0, %s205
          %s208 = sshll.u32 1, 14
          %s209 = sxor.u32 4294967295, %s208
          %s211 = sld [smem:[#allocation0]]
          %s212 = sadd.s32 2, %s211
          %s214 = sshll.u32 7, 26
          %s215 = sxor.u32 4294967295, %s214
          %s216 = sand.u32 0, %s215
          %s217 = sshll.u32 %s212, 26
          %s218 = sor.u32 %s216, %s217
          %s219 = sshll.u32 %s200, 4
          %s220 = int_to_ptr.vmem [resolvable:$true] %s219
          %226 = sst [smem:[#allocation7]] 1024
          %s227 = scalar_lea.smem [#allocation7], 1
          %228 = sst [smem:[%s227]] 256
          %s229 = scalar_lea.smem [#allocation7], 2
          %230 = sst [smem:[%s229]] 2
          %s231 = scalar_lea.smem [#allocation7], 3
          %232 = sst [smem:[%s231]] 128
          %s233 = scalar_lea.smem [#allocation7], 4
          %234 = sst [smem:[%s233]] 128
          %s235 = scalar_lea.smem [#allocation7], 5
          %236 = sst [smem:[%s235]] 8
          %238 = dma.general %s206, 512, %s220, %s197, [#allocation6], [#allocation7], %s218, 0
        $region20: #{batch_norm_forward.1} parent=15 // pred_fallthru
          _
        // Predicated region
        $region21: #{batch_norm_forward.1} parent=15 // pred_check
          %p239 = pneg %p64
        $region22: #{batch_norm_forward.1} parent=15 // pred_check_branch
          %241 = sbr.rel (%p239) target = $region24
        $region23: #{batch_norm_forward.1} parent=15 // pred_region
          %p242 = scmp.lt.s32.totalorder %s18, 3
          %s243 = scalar_select %p242, %s18, 3
          %s244 = scalar_lea.vmem %s1, %s243
        $region24: #{batch_norm_forward.1} parent=15 // pred_fallthru
          _
        // Predicated region
        $region25: #{batch_norm_forward.1} parent=15 // pred_check
          %p245 = pneg %p90
        $region26: #{batch_norm_forward.1} parent=15 // pred_check_branch
          %247 = sbr.rel (%p245) target = $region28
        $region27: #{batch_norm_forward.1} parent=15 // pred_region
          %p248 = scmp.lt.s32.totalorder %s18, 3
          %s249 = scalar_select %p248, %s18, 3
          %s250 = scalar_lea.vmem %s2, %s249
        $region28: #{batch_norm_forward.1} parent=15 // pred_fallthru
          _
      $region16: #{batch_norm_forward.1} parent=5 // pred_fallthru
        _
      %p251 = scmp.le.s32.totalorder 1, %s18
      %p252 = scmp.lt.s32.totalorder %s18, 5
      %p253 = pnand %p251, %p252
      %p254 = pneg %p253
      // Predicated region
      $region29: #{batch_norm_forward.1} parent=5 // pred_check
        _
      $region30: #{batch_norm_forward.1} parent=5 // pred_check_branch
        %256 = sbr.rel (%p253) target = $region32
      $region31: #{batch_norm_forward.1} parent=5 // pred_region
        %s257 = ssub.s32 %s18, 1
        %s258 = sand.u32 %s31, 1
        %s259 = scalar_lea.sflag [#allocation3], %s258
        %s260 = sand.u32 %s31, 1
        %s261 = smul.addr %s260, 32
        %s262 = scalar_lea.vmem [#allocation2], %s261
        // Predicated region
        $region33: #{batch_norm_forward.1} parent=31 // pred_check
          %p263 = pneg %p44
        $region34: #{batch_norm_forward.1} parent=31 // pred_check_branch
          %265 = sbr.rel (%p263) target = $region36
        $region35: #{batch_norm_forward.1} parent=31 // pred_region
          %266 = dma.done %s259, 512
        $region36: #{batch_norm_forward.1} parent=31 // pred_fallthru
          _
        %s267 = sand.u32 %s31, 1
        %s268 = scalar_lea.sflag [#allocation3], %s267
        %s269 = sand.u32 %s31, 1
        %s270 = smul.addr %s269, 32
        %s271 = scalar_lea.vmem [#allocation2], %s270
        %p272 = pneg %p44
        %p273 = pneg %p41
        %p274 = scmp.lt.s32.totalorder %s23, 3
        %s275 = scalar_select %p274, %s23, 3
        %s276 = scalar_lea.vmem %s1, %s275
        %p277 = pneg %p70
        %p278 = pneg %p67
        %p279 = scmp.lt.s32.totalorder %s23, 3
        %s280 = scalar_select %p279, %s23, 3
        %s281 = scalar_lea.vmem %s2, %s280
        %p282 = pneg %p96
        %p283 = pneg %p93
        %p284 = pneg %p122
        %p285 = pneg %p119
        %s286 = sand.u32 %s109, 1
        %s287 = scalar_lea.sflag [#allocation4], %s286
        %s288 = sand.u32 %s109, 1
        %s289 = smul.addr %s288, 32
        %s290 = scalar_lea.vmem [#allocation5], %s289
        %p291 = pneg %p148
        %p292 = pneg %p145
        %p293 = scmp.lt.s32.totalorder %s23, 3
        %s294 = scalar_select %p293, %s23, 3
        %s295 = scalar_lea.vmem %s4, %s294
        %p296 = pneg %p174
        %p297 = pneg %p171
        %p298 = scmp.lt.s32.totalorder %s23, 3
        %s299 = scalar_select %p298, %s23, 3
        %s300 = scalar_lea.vmem %s5, %s299
        %p301 = scmp.lt.s32.totalorder %s23, 3
        %s302 = scalar_select %p301, %s23, 3
        %s303 = scalar_lea.vmem %s1, %s302
        %p304 = scmp.lt.s32.totalorder %s23, 3
        %s305 = scalar_select %p304, %s23, 3
        %s306 = scalar_lea.vmem %s2, %s305
        %p307 = scmp.lt.s32.totalorder %s23, 3
        %s308 = scalar_select %p307, %s23, 3
        %s309 = scalar_lea.vmem %s4, %s308
        %p310 = scmp.lt.s32.totalorder %s23, 3
        %s311 = scalar_select %p310, %s23, 3
        %s312 = scalar_lea.vmem %s5, %s311
        %v313 = vld [vmem:[%s262] sm:$0xff]
        %v314 = vld [vmem:[%s262 + $0x8] sm:$0xff]
        %v315 = vld [vmem:[%s262 + $0x10] sm:$0xff]
        %v316 = vld [vmem:[%s262 + $0x18] sm:$0xff]
        %vm317 = vcmask 130048
        %v318 = vsel %vm317, %v313, 0.0
        %v319 = vsel %vm317, %v314, 0.0
        %v320 = vadd.f32 %v318, %v319
        %v321 = vsel %vm317, %v315, 0.0
        %v322 = vadd.f32 %v320, %v321
        %v323 = vsel %vm317, %v316, 0.0
        %v324 = vadd.f32 %v322, %v323
        %325 = vadd.xlane.f32.xlu0 %v324
        %v326 = vpop.xlane.xlu0 %325
        %v327 = vrot.slane %v326, 4
        %v328 = vadd.f32 %v326, %v327
        %v329 = vrot.slane %v328, 2
        %v330 = vadd.f32 %v328, %v329
        %v331 = vrot.slane %v330, 1
        %v332 = vadd.f32 %v330, %v331
        %s333 = vtos %v332
        %v334 = vstv %s333
        %v335 = vrcp.pop 512.0
        %v336 = vmul.f32 %v334, %v335
        %v337 = vsub.f32 %v313, %v336
        %v338 = vsub.f32 %v314, %v336
        %v339 = vsub.f32 %v315, %v336
        %v340 = vsub.f32 %v316, %v336
        %v341 = vmul.f32 %v337, %v337
        %v342 = vmul.f32 %v338, %v338
        %v343 = vmul.f32 %v339, %v339
        %v344 = vmul.f32 %v340, %v340
        %v345 = vsel %vm317, %v341, 0.0
        %v346 = vsel %vm317, %v342, 0.0
        %v347 = vadd.f32 %v345, %v346
        %v348 = vsel %vm317, %v343, 0.0
        %v349 = vadd.f32 %v347, %v348
        %v350 = vsel %vm317, %v344, 0.0
        %v351 = vadd.f32 %v349, %v350
        %352 = vadd.xlane.f32.xlu0 %v351
        %v353 = vpop.xlane.xlu0 %352
        %v354 = vrot.slane %v353, 4
        %v355 = vadd.f32 %v353, %v354
        %v356 = vrot.slane %v355, 2
        %v357 = vadd.f32 %v355, %v356
        %v358 = vrot.slane %v357, 1
        %v359 = vadd.f32 %v357, %v358
        %s360 = vtos %v359
        %v361 = vstv %s360
        %v362 = vmul.f32 %v361, %v335
        %v363 = vld [vmem:[%s303] sm:$0x1]
        %v364 = vadd.f32 %v362, 1e-05
        %v365 = vrsqrt.pop %v364
        %v366 = vmul.f32 %v363, %v365
        %v368 = vlaneseq
        %v369 = vshrl.u32 %v368, 7
        %v370 = vsub.s32 0, %v369
        %v371 = vrot.slane %v366, %v370
        %372 = vset.pattern.permute.xlu0 0
        %373 = vperm.xlu0 %372, %v371
        %v374 = vpop.permute.xlu0 %373
        %v376 = vmul.f32 %v337, %v374
        %v377 = vmul.f32 %v338, %v374
        %v378 = vmul.f32 %v339, %v374
        %v379 = vmul.f32 %v340, %v374
        %v380 = vld [vmem:[%s306] sm:$0x1]
        %v382 = vlaneseq
        %v383 = vshrl.u32 %v382, 7
        %v384 = vsub.s32 0, %v383
        %v385 = vrot.slane %v380, %v384
        %386 = vset.pattern.permute.xlu0 0
        %387 = vperm.xlu0 %386, %v385
        %v388 = vpop.permute.xlu0 %387
        %v390 = vadd.f32 %v376, %v388
        %v391 = vadd.f32 %v377, %v388
        %v392 = vadd.f32 %v378, %v388
        %v393 = vadd.f32 %v379, %v388
        %394 = vst.msk [vmem:[%s290] sm:$0xff] %vm317, %v390
        %395 = vst.msk [vmem:[%s290 + $0x8] sm:$0xff] %vm317, %v391
        %396 = vst.msk [vmem:[%s290 + $0x10] sm:$0xff] %vm317, %v392
        %397 = vst.msk [vmem:[%s290 + $0x18] sm:$0xff] %vm317, %v393
        %vm398 = vcmask 0
        %399 = vst.msk [vmem:[%s309] sm:$0x1] %vm398, %v336
        %400 = vst.msk [vmem:[%s312] sm:$0x1] %vm398, %v362
        %s401 = sand.u32 %s109, 1
        %s402 = scalar_lea.sflag [#allocation4], %s401
        %s403 = sand.u32 %s109, 1
        %s404 = smul.addr %s403, 32
        %s405 = scalar_lea.vmem [#allocation5], %s404
        %p406 = scmp.lt.s32.totalorder %s23, 3
        %s407 = scalar_select %p406, %s23, 3
        %s408 = scalar_lea.vmem %s4, %s407
        %p409 = scmp.lt.s32.totalorder %s23, 3
        %s410 = scalar_select %p409, %s23, 3
        %s411 = scalar_lea.vmem %s5, %s410
        // Predicated region
        $region37: #{batch_norm_forward.1} parent=31 // pred_check
          %p412 = pneg %p119
        $region38: #{batch_norm_forward.1} parent=31 // pred_check_branch
          %414 = sbr.rel (%p412) target = $region40
        $region39: #{batch_norm_forward.1} parent=31 // pred_region
          #allocation9 [shape = 'u32[6]{0}', space=smem, size = 0x18, scoped, tag = 'DMA stride descriptor']
          %s416 = ssub.s32 512, 512
          %417 = vsyncadd %s402, %s416
          %s418 = smul.addr %s23, 2
          %s419 = smul.addr %s418, 128
          %s420 = scalar_lea.hbm %s3, %s419
          %s422 = sshll.u32 1, 14
          %s423 = sxor.u32 4294967295, %s422
          %s426 = sshll.u32 7, 18
          %s427 = sxor.u32 4294967295, %s426
          %s428 = sand.u32 0, %s427
          %s430 = sor.u32 %s428, 0
          %s432 = sshll.u32 3, 24
          %s433 = sxor.u32 4294967295, %s432
          %s434 = sand.u32 %s430, %s433
          %s436 = sor.u32 %s434, 0
          %s437 = sshll.u32 %s405, 4
          %s438 = int_to_ptr.vmem [resolvable:$true] %s437
          %444 = sst [smem:[#allocation9]] 256
          %s445 = scalar_lea.smem [#allocation9], 1
          %446 = sst [smem:[%s445]] 1024
          %s447 = scalar_lea.smem [#allocation9], 2
          %448 = sst [smem:[%s447]] 2
          %s449 = scalar_lea.smem [#allocation9], 3
          %450 = sst [smem:[%s449]] 128
          %s451 = scalar_lea.smem [#allocation9], 4
          %452 = sst [smem:[%s451]] 128
          %s453 = scalar_lea.smem [#allocation9], 5
          %454 = sst [smem:[%s453]] 8
          %456 = dma.general %s438, 512, %s420, %s402, [#allocation8], [#allocation9], %s436, 0
        $region40: #{batch_norm_forward.1} parent=31 // pred_fallthru
          _
        // Predicated region
        $region41: #{batch_norm_forward.1} parent=31 // pred_check
          %p457 = pneg %p145
        $region42: #{batch_norm_forward.1} parent=31 // pred_check_branch
          %459 = sbr.rel (%p457) target = $region44
        $region43: #{batch_norm_forward.1} parent=31 // pred_region
          _
        $region44: #{batch_norm_forward.1} parent=31 // pred_fallthru
          _
        // Predicated region
        $region45: #{batch_norm_forward.1} parent=31 // pred_check
          %p460 = pneg %p171
        $region46: #{batch_norm_forward.1} parent=31 // pred_check_branch
          %462 = sbr.rel (%p460) target = $region48
        $region47: #{batch_norm_forward.1} parent=31 // pred_region
          _
        $region48: #{batch_norm_forward.1} parent=31 // pred_fallthru
          _
      $region32: #{batch_norm_forward.1} parent=5 // pred_fallthru
        _
      %p463 = scmp.le.s32.totalorder 2, %s18
      // Predicated region
      $region49: #{batch_norm_forward.1} parent=5 // pred_check
        %p464 = pneg %p463
      $region50: #{batch_norm_forward.1} parent=5 // pred_check_branch
        %466 = sbr.rel (%p464) target = $region52
      $region51: #{batch_norm_forward.1} parent=5 // pred_region
        %s467 = ssub.s32 %s18, 2
        // Predicated region
        $region53: #{batch_norm_forward.1} parent=51 // pred_check
          %p468 = pneg %p125
        $region54: #{batch_norm_forward.1} parent=51 // pred_check_branch
          %470 = sbr.rel (%p468) target = $region56
        $region55: #{batch_norm_forward.1} parent=51 // pred_region
          %s471 = sand.u32 %s110, 1
          %s472 = scalar_lea.sflag [#allocation4], %s471
          %s473 = sand.u32 %s110, 1
          %s474 = smul.addr %s473, 32
          %s475 = scalar_lea.vmem [#allocation5], %s474
          %476 = dma.done %s472, 512
        $region56: #{batch_norm_forward.1} parent=51 // pred_fallthru
          _
        // Predicated region
        $region57: #{batch_norm_forward.1} parent=51 // pred_check
          %p477 = pneg %p151
        $region58: #{batch_norm_forward.1} parent=51 // pred_check_branch
          %479 = sbr.rel (%p477) target = $region60
        $region59: #{batch_norm_forward.1} parent=51 // pred_region
          %p480 = scmp.lt.s32.totalorder %s24, 3
          %s481 = scalar_select %p480, %s24, 3
          %s482 = scalar_lea.vmem %s4, %s481
        $region60: #{batch_norm_forward.1} parent=51 // pred_fallthru
          _
        // Predicated region
        $region61: #{batch_norm_forward.1} parent=51 // pred_check
          %p483 = pneg %p177
        $region62: #{batch_norm_forward.1} parent=51 // pred_check_branch
          %485 = sbr.rel (%p483) target = $region64
        $region63: #{batch_norm_forward.1} parent=51 // pred_region
          %p486 = scmp.lt.s32.totalorder %s24, 3
          %s487 = scalar_select %p486, %s24, 3
          %s488 = scalar_lea.vmem %s5, %s487
        $region64: #{batch_norm_forward.1} parent=51 // pred_fallthru
          _
      $region52: #{batch_norm_forward.1} parent=5 // pred_fallthru
        _
    $region6: #{batch_norm_forward.1} parent=1 // loop_footer
      %s22 = sadd.s32 1, %s18
    $region7: #{batch_norm_forward.1} parent=1 // loop_footer_branch
      %17 = sbr.rel target = $region3
    $region8: #{batch_norm_forward.1} parent=1 // loop_exit
      _
    %489 = vsyncpa [#allocation3], 1
    %s490 = scalar_lea.sflag [#allocation3], 1
    %491 = vsyncpa %s490, 1
    %492 = vsyncpa [#allocation4], 1
    %s493 = scalar_lea.sflag [#allocation4], 1
    %494 = vsyncpa %s493, 1

</llo_original>
